<compile_context>
chip_gen: v7x
topology: tpu7x:2x2x1
jax: 0.10.0
libtpu: 0.0.40
codegen_flags: <defaults>
</compile_context>

<pallas_src>
import functools

import jax
import jax.numpy as jnp
from jax.experimental import pallas as pl
from jax.experimental.pallas import tpu as pltpu

EPS = 1e-5
LANE = 128
SUBLANE = 8


def _round_up(x, m):
    return ((x + m - 1) // m) * m


def _cdiv(a, b):
    return -(-a // b)


def _vmem_capacity_bytes():
    try:
        return int(pltpu.get_tpu_info().vmem_capacity_bytes)
    except Exception:
        return 64 << 20  # conservative fallback: v7x per-TC VMEM


def _classblock_kernel(x_ref, w1_ref, b1_ref, w2_ref, b2_ref, out_ref, *,
                       precision):
    # Bottleneck linear (BatchNorm already folded into w1/b1): MXU, f32 acc.
    h = jnp.dot(x_ref[...], w1_ref[...],
                preferred_element_type=jnp.float32,
                precision=precision) + b1_ref[...]
    # TODO(synk): LeakyReLU (relu=True config) not implemented; default config
    # is relu=False so nothing is applied here.
    # Classifier linear (MXU) + bias.
    out_ref[...] = (jnp.dot(h.astype(w2_ref.dtype), w2_ref[...],
                            preferred_element_type=jnp.float32,
                            precision=precision)
                    + b2_ref[...]).astype(out_ref.dtype)


def prepare_params(params, *, use_bf16=True):
    """One-time weight prep (call once, cache the result).

    Folds eval-mode BatchNorm into the bottleneck linear, zero-pads D/K/C up
    to lane multiples so both matmuls and the output store are lane-dense,
    and (optionally) casts the matmul operands to bf16.  Biases stay fp32.
    """
    w1, b1 = params["w1"], params["b1"]
    gamma, beta = params["gamma"], params["beta"]
    rmean, rvar = params["running_mean"], params["running_var"]
    w2, b2 = params["w2"], params["b2"]

    D, K = w1.shape
    C = w2.shape[1]
    Dp, Kp, Cp = _round_up(D, LANE), _round_up(K, LANE), _round_up(C, LANE)

    # --- Fold eval-mode BatchNorm into the bottleneck linear (fp32 math). ---
    s = (gamma * jax.lax.rsqrt(rvar + EPS)).astype(jnp.float32)   # (1, K)
    w1f = w1.astype(jnp.float32) * s                              # (D, K)
    b1f = (b1.astype(jnp.float32) - rmean) * s + beta             # (1, K)

    w1p = jnp.zeros((Dp, Kp), jnp.float32).at[:D, :K].set(w1f)
    b1p = jnp.zeros((1, Kp), jnp.float32).at[:, :K].set(b1f)
    w2p = jnp.zeros((Kp, Cp), jnp.float32).at[:K, :C].set(w2.astype(jnp.float32))
    b2p = jnp.zeros((1, Cp), jnp.float32).at[:, :C].set(b2.astype(jnp.float32))

    wdt = jnp.bfloat16 if use_bf16 else jnp.float32
    # TODO(synk): optional fp8 weight path for v7x (fp8 weights, bf16
    # activations, f32 accumulate) not implemented; bf16 used on all chips.
    weights = dict(w1=w1p.astype(wdt), b1=b1p, w2=w2p.astype(wdt), b2=b2p)
    weights = jax.block_until_ready(weights)   # materialize once, not per call
    return dict(weights=weights, dims=(D, K, C))


@functools.partial(
    jax.jit,
    static_argnames=("dims", "block_b", "out_dtype", "precision",
                     "single_buffer_weights"))
def _forward(x, weights, *, dims, block_b, out_dtype, precision,
             single_buffer_weights):
    D, K, C = dims
    B, Dx = x.shape
    assert Dx == D, f"x feature dim {Dx} != prepared input_dim {D}"

    w1, b1, w2, b2 = weights["w1"], weights["b1"], weights["w2"], weights["b2"]
    Dp, Kp = w1.shape
    Cp = w2.shape[1]

    in_dtype = w1.dtype
    x_itemsize = jnp.dtype(in_dtype).itemsize
    out_itemsize = jnp.dtype(out_dtype).itemsize

    # --- Batch tiling: fit VMEM, keep padding slack < 1 sublane group per
    # --- grid step, and use >=2 tiles for mid/large batches (v7x 2 TCs).
    vmem_cap = _vmem_capacity_bytes()
    budget = int(0.75 * vmem_cap)
    w_bytes = sum(int(a.size) * a.dtype.itemsize for a in (w1, b1, w2, b2))
    per_row = 2 * Dp * x_itemsize + 2 * Cp * out_itemsize + Kp * 4
    tb_max = max(SUBLANE,
                 (max(budget - 2 * w_bytes, 0) // per_row) // SUBLANE * SUBLANE)

    Bp = _round_up(B, SUBLANE)
    tb_desired = max(SUBLANE, min(_round_up(block_b, SUBLANE), tb_max))
    ngrid = _cdiv(Bp, tb_desired)
    if ngrid == 1 and Bp >= 2 * 64:
        ngrid = 2                       # let both v7x TensorCores get work
    tb = _round_up(_cdiv(Bp, ngrid), SUBLANE)
    Bp = ngrid * tb                     # slack < ngrid * SUBLANE rows

    # --- Per-call x prep: cast (bf16 path) + pad to (Bp, Dp). ---
    xc = x.astype(in_dtype)
    if (Bp, Dp) != (B, D):
        xp = jnp.zeros((Bp, Dp), in_dtype).at[:B, :D].set(xc)
    else:
        xp = xc

    vmem_limit = 2 * w_bytes + tb * per_row + (8 << 20)   # + compiler scratch
    vmem_limit = int(min(max(vmem_limit, 16 << 20), int(0.9 * vmem_cap)))

    flops = 2 * Bp * (Dp * Kp + Kp * Cp)
    bytes_accessed = int(Bp * Dp * x_itemsize + w_bytes + Bp * Cp * out_itemsize)

    def _w_spec(shape):
        # Constant index_map -> weights stay resident; single-buffer to save
        # VMEM (double-buffering them is pure waste).
        if single_buffer_weights:
            return pl.BlockSpec(shape, lambda i: (0, 0),
                                pipeline_mode=pl.Buffered(1))
        return pl.BlockSpec(shape, lambda i: (0, 0))

    kernel = functools.partial(_classblock_kernel, precision=precision)

    out = pl.pallas_call(
        kernel,
        out_shape=jax.ShapeDtypeStruct((Bp, Cp), out_dtype),
        grid=(ngrid,),
        in_specs=[
            pl.BlockSpec((tb, Dp), lambda i: (i, 0)),   # x: tiled over batch
            _w_spec(w1.shape),
            _w_spec(b1.shape),
            _w_spec(w2.shape),
            _w_spec(b2.shape),
        ],
        out_specs=pl.BlockSpec((tb, Cp), lambda i: (i, 0)),  # lane-dense out
        compiler_params=pltpu.CompilerParams(
            dimension_semantics=("parallel",),
            vmem_limit_bytes=vmem_limit),
        cost_estimate=pl.CostEstimate(
            flops=flops, transcendentals=0, bytes_accessed=bytes_accessed),
    )(xp, w1, b1, w2, b2)

    return out[:B, :C]


def class_block_forward(x, prepared, *, block_b=1024, out_dtype=jnp.float32,
                        precision=None):
    """x: (B, input_dim).  prepared: output of prepare_params (cached).

    Default path: bf16 operands (from prepare_params), fp32 accumulation,
    fp32 output.  `precision` only matters for fp32-prepared weights.
    """
    weights, dims = prepared["weights"], prepared["dims"]
    kwargs = dict(dims=tuple(int(d) for d in dims), block_b=int(block_b),
                  out_dtype=out_dtype, precision=precision)
    try:
        return _forward(x, weights, single_buffer_weights=True, **kwargs)
    except Exception:
        # TODO(synk): pl.Buffered(1) single-buffering not supported on this
        # jax version; fall back to default double-buffered weight streams.
        return _forward(x, weights, single_buffer_weights=False, **kwargs)


def init_params(key, input_dim, num_bottleneck, class_num):
    """Deterministic synthetic init mimicking weights_init_kaiming /
    weights_init_classifier shapes & scales (not a checkpoint load)."""
    k1, k2, k3 = jax.random.split(key, 3)
    # Bottleneck linear: kaiming-style normal, stored transposed (in, out)
    w1 = jax.random.normal(k1, (input_dim, num_bottleneck), jnp.float32) \
         * jnp.sqrt(2.0 / num_bottleneck)
    b1 = jnp.zeros((1, num_bottleneck), jnp.float32)
    # BatchNorm1d: weight ~ N(1, 0.02), bias = 0, running stats = (0, 1)
    gamma = 1.0 + 0.02 * jax.random.normal(k2, (1, num_bottleneck), jnp.float32)
    beta = jnp.zeros((1, num_bottleneck), jnp.float32)
    running_mean = jnp.zeros((1, num_bottleneck), jnp.float32)
    running_var = jnp.ones((1, num_bottleneck), jnp.float32)
    # Classifier linear: weight ~ N(0, 0.001), bias = 0, stored transposed
    w2 = 0.001 * jax.random.normal(k3, (num_bottleneck, class_num), jnp.float32)
    b2 = jnp.zeros((1, class_num), jnp.float32)
    return dict(w1=w1, b1=b1, gamma=gamma, beta=beta,
                running_mean=running_mean, running_var=running_var,
                w2=w2, b2=b2)


def _reference(x, p):
    hp = jax.lax.Precision.HIGHEST
    h = jnp.dot(x, p["w1"], precision=hp) + p["b1"]
    h = (h - p["running_mean"]) * jax.lax.rsqrt(p["running_var"] + EPS) \
        * p["gamma"] + p["beta"]
    return jnp.dot(h, p["w2"], precision=hp) + p["b2"]


if __name__ == "__main__":
    # Small shapes consistent with ClassBlock(input_dim, class_num, droprate)
    B, input_dim, num_bottleneck, class_num = 8, 32, 64, 16

    key = jax.random.PRNGKey(0)
    kx, kp = jax.random.split(key)
    x = jax.random.normal(kx, (B, input_dim), jnp.float32)
    params = init_params(kp, input_dim, num_bottleneck, class_num)

    ref = _reference(x, params)

    # Default fast path: bf16 operands, fp32 accumulation. Loose tolerance.
    prep_bf16 = prepare_params(params, use_bf16=True)
    out = jax.block_until_ready(class_block_forward(x, prep_bf16))
    assert out.shape == (B, class_num)
    assert jnp.allclose(out, ref, atol=5e-3, rtol=5e-2), "bf16 mismatch vs ref"

    # fp32 numerics gate: HIGHEST requested explicitly (not the perf default)
    # so the fold/pad path is verified tightly against the fp32 reference.
    prep_f32 = prepare_params(params, use_bf16=False)
    out32 = jax.block_until_ready(
        class_block_forward(x, prep_f32, precision=jax.lax.Precision.HIGHEST))
    assert out32.shape == (B, class_num)
    assert jnp.allclose(out32, ref, atol=1e-4, rtol=1e-4), "fp32 mismatch vs ref"

    print("KERNEL_OK")
</pallas_src>

<mosaic_0001>
module attributes {stable_mosaic.version = 11 : i64} {
  func.func @_classblock_kernel(%arg0: i32, %arg1: memref<8x128xbf16, #tpu.memory_space<vmem>>, %arg2: memref<128x128xbf16, #tpu.memory_space<vmem>>, %arg3: memref<1x128xf32, #tpu.memory_space<vmem>>, %arg4: memref<128x128xbf16, #tpu.memory_space<vmem>>, %arg5: memref<1x128xf32, #tpu.memory_space<vmem>>, %arg6: memref<8x128xf32, #tpu.memory_space<vmem>>) attributes {dimension_semantics = [#tpu.dimension_semantics<parallel>], iteration_bounds = array<i64: 1>, scalar_prefetch = 0 : i64, scratch_operands = 0 : i64, tpu.core_type = #tpu.core_type<tc>, window_params = [{transform_indices = @transform_0, window_bounds = array<i64: 8, 128>}, {pipeline_mode = #tpu.pipeline_mode<synchronous>, transform_indices = @transform_1, window_bounds = array<i64: 128, 128>}, {pipeline_mode = #tpu.pipeline_mode<synchronous>, transform_indices = @transform_2, window_bounds = array<i64: 1, 128>}, {pipeline_mode = #tpu.pipeline_mode<synchronous>, transform_indices = @transform_3, window_bounds = array<i64: 128, 128>}, {pipeline_mode = #tpu.pipeline_mode<synchronous>, transform_indices = @transform_4, window_bounds = array<i64: 1, 128>}, {transform_indices = @transform_5, window_bounds = array<i64: 8, 128>}]} {
    %c0 = arith.constant 0 : index
    %c0_0 = arith.constant 0 : index
    %0 = vector.load %arg1[%c0, %c0_0] : memref<8x128xbf16, #tpu.memory_space<vmem>>, vector<8x128xbf16>
    %c0_1 = arith.constant 0 : index
    %c0_2 = arith.constant 0 : index
    %1 = vector.load %arg2[%c0_1, %c0_2] : memref<128x128xbf16, #tpu.memory_space<vmem>>, vector<128x128xbf16>
    %cst = arith.constant dense<0.000000e+00> : vector<8x128xf32>
    %2 = tpu.matmul %0, %1, %cst {dimension_numbers = #tpu.dot_dimension_numbers<[1], [0], [0], [1], [0, 0, 1, 1], [], []>} : vector<8x128xbf16>, vector<128x128xbf16>, vector<8x128xf32> -> vector<8x128xf32>
    %c0_3 = arith.constant 0 : index
    %c0_4 = arith.constant 0 : index
    %3 = vector.load %arg3[%c0_3, %c0_4] : memref<1x128xf32, #tpu.memory_space<vmem>>, vector<1x128xf32>
    %4 = vector.broadcast %3 : vector<1x128xf32> to vector<8x128xf32>
    %5 = arith.addf %2, %4 : vector<8x128xf32>
    %6 = arith.truncf %5 : vector<8x128xf32> to vector<8x128xbf16>
    %c0_5 = arith.constant 0 : index
    %c0_6 = arith.constant 0 : index
    %7 = vector.load %arg4[%c0_5, %c0_6] : memref<128x128xbf16, #tpu.memory_space<vmem>>, vector<128x128xbf16>
    %cst_7 = arith.constant dense<0.000000e+00> : vector<8x128xf32>
    %8 = tpu.matmul %6, %7, %cst_7 {dimension_numbers = #tpu.dot_dimension_numbers<[1], [0], [0], [1], [0, 0, 1, 1], [], []>} : vector<8x128xbf16>, vector<128x128xbf16>, vector<8x128xf32> -> vector<8x128xf32>
    %c0_8 = arith.constant 0 : index
    %c0_9 = arith.constant 0 : index
    %9 = vector.load %arg5[%c0_8, %c0_9] : memref<1x128xf32, #tpu.memory_space<vmem>>, vector<1x128xf32>
    %10 = vector.broadcast %9 : vector<1x128xf32> to vector<8x128xf32>
    %11 = arith.addf %8, %10 : vector<8x128xf32>
    %c0_10 = arith.constant 0 : index
    %c0_11 = arith.constant 0 : index
    %12 = vector.load %arg6[%c0_10, %c0_11] : memref<8x128xf32, #tpu.memory_space<vmem>>, vector<8x128xf32>
    tpu.vector_store %arg6[%c0_10, %c0_11], %11 {strides = array<i32>} : memref<8x128xf32, #tpu.memory_space<vmem>>, vector<8x128xf32>,
    return
  }
  func.func @transform_0(%arg0: i32) -> (i32, i32) {
    %c0_i32 = arith.constant 0 : i32
    %c0_i32_0 = arith.constant 0 : i32
    return %arg0, %c0_i32 : i32, i32
  }
  func.func @transform_1(%arg0: i32) -> (i32, i32) {
    %c0_i32 = arith.constant 0 : i32
    %c0_i32_0 = arith.constant 0 : i32
    %c0_i32_1 = arith.constant 0 : i32
    return %c0_i32, %c0_i32_0 : i32, i32
  }
  func.func @transform_2(%arg0: i32) -> (i32, i32) {
    %c0_i32 = arith.constant 0 : i32
    %c0_i32_0 = arith.constant 0 : i32
    %c0_i32_1 = arith.constant 0 : i32
    return %c0_i32, %c0_i32_0 : i32, i32
  }
  func.func @transform_3(%arg0: i32) -> (i32, i32) {
    %c0_i32 = arith.constant 0 : i32
    %c0_i32_0 = arith.constant 0 : i32
    %c0_i32_1 = arith.constant 0 : i32
    return %c0_i32, %c0_i32_0 : i32, i32
  }
  func.func @transform_4(%arg0: i32) -> (i32, i32) {
    %c0_i32 = arith.constant 0 : i32
    %c0_i32_0 = arith.constant 0 : i32
    %c0_i32_1 = arith.constant 0 : i32
    return %c0_i32, %c0_i32_0 : i32, i32
  }
  func.func @transform_5(%arg0: i32) -> (i32, i32) {
    %c0_i32 = arith.constant 0 : i32
    %c0_i32_0 = arith.constant 0 : i32
    return %arg0, %c0_i32 : i32, i32
  }
}

module attributes {stable_mosaic.version = 11 : i64} {
  func.func @_classblock_kernel(%arg0: i32, %arg1: memref<8x128xbf16, #tpu.memory_space<vmem>>, %arg2: memref<128x128xbf16, #tpu.memory_space<vmem>>, %arg3: memref<1x128xf32, #tpu.memory_space<vmem>>, %arg4: memref<128x128xbf16, #tpu.memory_space<vmem>>, %arg5: memref<1x128xf32, #tpu.memory_space<vmem>>, %arg6: memref<8x128xf32, #tpu.memory_space<vmem>>) attributes {dimension_semantics = [#tpu.dimension_semantics<parallel>], iteration_bounds = array<i64: 1>, scalar_prefetch = 0 : i64, scratch_operands = 0 : i64, tpu.core_type = #tpu.core_type<tc>, window_params = [{transform_indices = @transform_0, window_bounds = array<i64: 8, 128>}, {pipeline_mode = #tpu.pipeline_mode<synchronous>, transform_indices = @transform_1, window_bounds = array<i64: 128, 128>}, {pipeline_mode = #tpu.pipeline_mode<synchronous>, transform_indices = @transform_2, window_bounds = array<i64: 1, 128>}, {pipeline_mode = #tpu.pipeline_mode<synchronous>, transform_indices = @transform_3, window_bounds = array<i64: 128, 128>}, {pipeline_mode = #tpu.pipeline_mode<synchronous>, transform_indices = @transform_4, window_bounds = array<i64: 1, 128>}, {transform_indices = @transform_5, window_bounds = array<i64: 8, 128>}]} {
    %c0 = arith.constant 0 : index
    %c0_0 = arith.constant 0 : index
    %0 = vector.load %arg1[%c0, %c0_0] : memref<8x128xbf16, #tpu.memory_space<vmem>>, vector<8x128xbf16>
    %c0_1 = arith.constant 0 : index
    %c0_2 = arith.constant 0 : index
    %1 = vector.load %arg2[%c0_1, %c0_2] : memref<128x128xbf16, #tpu.memory_space<vmem>>, vector<128x128xbf16>
    %cst = arith.constant dense<0.000000e+00> : vector<8x128xf32>
    %2 = tpu.matmul %0, %1, %cst {dimension_numbers = #tpu.dot_dimension_numbers<[1], [0], [0], [1], [0, 0, 1, 1], [], []>} : vector<8x128xbf16>, vector<128x128xbf16>, vector<8x128xf32> -> vector<8x128xf32>
    %c0_3 = arith.constant 0 : index
    %c0_4 = arith.constant 0 : index
    %3 = vector.load %arg3[%c0_3, %c0_4] : memref<1x128xf32, #tpu.memory_space<vmem>>, vector<1x128xf32>
    %4 = vector.broadcast %3 : vector<1x128xf32> to vector<8x128xf32>
    %5 = arith.addf %2, %4 : vector<8x128xf32>
    %6 = arith.truncf %5 : vector<8x128xf32> to vector<8x128xbf16>
    %c0_5 = arith.constant 0 : index
    %c0_6 = arith.constant 0 : index
    %7 = vector.load %arg4[%c0_5, %c0_6] : memref<128x128xbf16, #tpu.memory_space<vmem>>, vector<128x128xbf16>
    %cst_7 = arith.constant dense<0.000000e+00> : vector<8x128xf32>
    %8 = tpu.matmul %6, %7, %cst_7 {dimension_numbers = #tpu.dot_dimension_numbers<[1], [0], [0], [1], [0, 0, 1, 1], [], []>} : vector<8x128xbf16>, vector<128x128xbf16>, vector<8x128xf32> -> vector<8x128xf32>
    %c0_8 = arith.constant 0 : index
    %c0_9 = arith.constant 0 : index
    %9 = vector.load %arg5[%c0_8, %c0_9] : memref<1x128xf32, #tpu.memory_space<vmem>>, vector<1x128xf32>
    %10 = vector.broadcast %9 : vector<1x128xf32> to vector<8x128xf32>
    %11 = arith.addf %8, %10 : vector<8x128xf32>
    %c0_10 = arith.constant 0 : index
    %c0_11 = arith.constant 0 : index
    %12 = vector.load %arg6[%c0_10, %c0_11] : memref<8x128xf32, #tpu.memory_space<vmem>>, vector<8x128xf32>
    tpu.vector_store %arg6[%c0_10, %c0_11], %11 {strides = array<i32>} : memref<8x128xf32, #tpu.memory_space<vmem>>, vector<8x128xf32>,
    return
  }
  func.func @transform_0(%arg0: i32) -> (i32, i32) {
    %c0_i32 = arith.constant 0 : i32
    %c0_i32_0 = arith.constant 0 : i32
    return %arg0, %c0_i32 : i32, i32
  }
  func.func @transform_1(%arg0: i32) -> (i32, i32) {
    %c0_i32 = arith.constant 0 : i32
    %c0_i32_0 = arith.constant 0 : i32
    %c0_i32_1 = arith.constant 0 : i32
    return %c0_i32, %c0_i32_0 : i32, i32
  }
  func.func @transform_2(%arg0: i32) -> (i32, i32) {
    %c0_i32 = arith.constant 0 : i32
    %c0_i32_0 = arith.constant 0 : i32
    %c0_i32_1 = arith.constant 0 : i32
    return %c0_i32, %c0_i32_0 : i32, i32
  }
  func.func @transform_3(%arg0: i32) -> (i32, i32) {
    %c0_i32 = arith.constant 0 : i32
    %c0_i32_0 = arith.constant 0 : i32
    %c0_i32_1 = arith.constant 0 : i32
    return %c0_i32, %c0_i32_0 : i32, i32
  }
  func.func @transform_4(%arg0: i32) -> (i32, i32) {
    %c0_i32 = arith.constant 0 : i32
    %c0_i32_0 = arith.constant 0 : i32
    %c0_i32_1 = arith.constant 0 : i32
    return %c0_i32, %c0_i32_0 : i32, i32
  }
  func.func @transform_5(%arg0: i32) -> (i32, i32) {
    %c0_i32 = arith.constant 0 : i32
    %c0_i32_0 = arith.constant 0 : i32
    return %arg0, %c0_i32 : i32, i32
  }
}

</mosaic_0001>

<llo_original>
// kernel: _forward.1
$region0: #{_forward.1}
  #allocation0 [shape = 'u32[]', space=smem, size = 0x4, offset = 0x4, fixed_abs, tag = 'smem constant byte address 0x4 - core index']
  #allocation1 [shape = 'u32[144,128]{1,0:T(1,128)}', space=vmem, size = 0x12000, scoped, tag = 'internal scratch']
  %s0 = inlined_call_operand.vmem [shape: bf16[8,128], index: 0, kind: input, shape index: {}]
  %s1 = inlined_call_operand.hbm [shape: bf16[128,128], index: 1, kind: input, shape index: {}]
  %s2 = inlined_call_operand.vmem [shape: f32[1,128], index: 2, kind: input, shape index: {}]
  %s3 = inlined_call_operand.hbm [shape: bf16[128,128], index: 3, kind: input, shape index: {}]
  %s4 = inlined_call_operand.vmem [shape: f32[1,128], index: 4, kind: input, shape index: {}]
  %s5 = inlined_call_operand.hbm [shape: f32[8,128], index: 5, kind: output, shape index: {}]
  %s6 = sld [smem:[#allocation0]]
  $region38: #{_forward.1} parent=0
    _
  %s8 = ssub.s32 1, %s6
  %s9 = scalar_select 0, %s8, %s6
  $region1: #{_forward.1} parent=0
    #allocation2 [shape = 'u8[32768]{0}', space=vmem, size = 0x8000, scoped, tag = 'input window, operand 1, single buffered']
    #allocation3 [shape = 's32[1]{0}', space=sflag, size = 0x4, scoped, tag = 'scoped memory for _forward.1']
    #allocation4 [shape = 's32[1]{0}', space=sflag, size = 0x4, scoped, tag = 'scoped memory for _forward.1']
    #allocation5 [shape = 'u8[32768]{0}', space=vmem, size = 0x8000, scoped, tag = 'input window, operand 3, single buffered']
    #allocation6 [shape = 's32[1]{0}', space=sflag, size = 0x4, scoped, tag = 'scoped memory for _forward.1']
    #allocation7 [shape = 'u8[4096]{0}', space=vmem, size = 0x1000, scoped, tag = 'output window, operand 0, single buffered']
    %10 = vsyncpa [#allocation3], 0
    %11 = vsyncpa [#allocation6], 0
    %12 = vsyncpa [#allocation4], 0
    // Predicated region
    $region2: #{_forward.1} parent=1 // pred_check
      _
    $region3: #{_forward.1} parent=1 // pred_check_branch
      %14 = sbr.rel (0) target = $region5
    $region4: #{_forward.1} parent=1 // pred_region
      _
    $region5: #{_forward.1} parent=1 // pred_fallthru
      _
    // Predicated region
    $region6: #{_forward.1} parent=1 // pred_check
      _
    $region7: #{_forward.1} parent=1 // pred_check_branch
      %16 = sbr.rel (0) target = $region9
    $region8: #{_forward.1} parent=1 // pred_region
      %s18 = ssub.s32 1024, 1024
      %19 = vsyncadd [#allocation3], %s18
      %s20 = sshll.u32 [#allocation2], 4
      %s21 = int_to_ptr.vmem [resolvable:$true] %s20
      %26 = dma.hbm_to_vmem [thread:$0]  %s1, 1024, %s21, [#allocation3], 64, 64, 4
    $region9: #{_forward.1} parent=1 // pred_fallthru
      _
    // Predicated region
    $region10: #{_forward.1} parent=1 // pred_check
      _
    $region11: #{_forward.1} parent=1 // pred_check_branch
      %28 = sbr.rel (0) target = $region13
    $region12: #{_forward.1} parent=1 // pred_region
      _
    $region13: #{_forward.1} parent=1 // pred_fallthru
      _
    // Predicated region
    $region14: #{_forward.1} parent=1 // pred_check
      _
    $region15: #{_forward.1} parent=1 // pred_check_branch
      %30 = sbr.rel (0) target = $region17
    $region16: #{_forward.1} parent=1 // pred_region
      %s32 = ssub.s32 1024, 1024
      %33 = vsyncadd [#allocation6], %s32
      %s34 = sshll.u32 [#allocation5], 4
      %s35 = int_to_ptr.vmem [resolvable:$true] %s34
      %40 = dma.hbm_to_vmem [thread:$0]  %s3, 1024, %s35, [#allocation6], 64, 64, 4
    $region17: #{_forward.1} parent=1 // pred_fallthru
      _
    // Predicated region
    $region18: #{_forward.1} parent=1 // pred_check
      _
    $region19: #{_forward.1} parent=1 // pred_check_branch
      %42 = sbr.rel (0) target = $region21
    $region20: #{_forward.1} parent=1 // pred_region
      _
    $region21: #{_forward.1} parent=1 // pred_fallthru
      _
    // Predicated region
    $region22: #{_forward.1} parent=1 // pred_check
      _
    $region23: #{_forward.1} parent=1 // pred_check_branch
      %44 = sbr.rel (0) target = $region25
    $region24: #{_forward.1} parent=1 // pred_region
      %45 = dma.done [#allocation3], 1024
    $region25: #{_forward.1} parent=1 // pred_fallthru
      _
    // Predicated region
    $region26: #{_forward.1} parent=1 // pred_check
      _
    $region27: #{_forward.1} parent=1 // pred_check_branch
      %47 = sbr.rel (0) target = $region29
    $region28: #{_forward.1} parent=1 // pred_region
      %48 = dma.done [#allocation6], 1024
    $region29: #{_forward.1} parent=1 // pred_fallthru
      _
    %v50 = vld [vmem:[%s0] sm:$0xf]
    %v51 = vld [vmem:[#allocation2] sm:$0xf]
    %v52 = vld [vmem:[#allocation2 + $0x4] sm:$0xf]
    %v53 = vld [vmem:[#allocation2 + $0x8] sm:$0xf]
    %v54 = vld [vmem:[#allocation2 + $0xc] sm:$0xf]
    %v55 = vld [vmem:[#allocation2 + $0x10] sm:$0xf]
    %v56 = vld [vmem:[#allocation2 + $0x14] sm:$0xf]
    %v57 = vld [vmem:[#allocation2 + $0x18] sm:$0xf]
    %v58 = vld [vmem:[#allocation2 + $0x1c] sm:$0xf]
    %v59 = vld [vmem:[#allocation2 + $0x20] sm:$0xf]
    %v60 = vld [vmem:[#allocation2 + $0x24] sm:$0xf]
    %v61 = vld [vmem:[#allocation2 + $0x28] sm:$0xf]
    %v62 = vld [vmem:[#allocation2 + $0x2c] sm:$0xf]
    %v63 = vld [vmem:[#allocation2 + $0x30] sm:$0xf]
    %v64 = vld [vmem:[#allocation2 + $0x34] sm:$0xf]
    %v65 = vld [vmem:[#allocation2 + $0x38] sm:$0xf]
    %v66 = vld [vmem:[#allocation2 + $0x3c] sm:$0xf]
    %v67 = vld [vmem:[%s2] sm:$0x1]
    %v69 = vlaneseq
    %v70 = vshrl.u32 %v69, 7
    %v71 = vsub.s32 0, %v70
    %v72 = vrot.slane %v67, %v71
    %v90 = vunpack.c.l.b16 %v51
    %v91 = vunpack.c.l.b16 %v52
    %v92 = vunpack.c.l.b16 %v53
    %v93 = vunpack.c.l.b16 %v54
    %v94 = vunpack.c.l.b16 %v55
    %v95 = vunpack.c.l.b16 %v56
    %v96 = vunpack.c.l.b16 %v57
    %v97 = vunpack.c.l.b16 %v58
    %v98 = vunpack.c.l.b16 %v59
    %v99 = vunpack.c.l.b16 %v60
    %v100 = vunpack.c.l.b16 %v61
    %v101 = vunpack.c.l.b16 %v62
    %v102 = vunpack.c.l.b16 %v63
    %v103 = vunpack.c.l.b16 %v64
    %v104 = vunpack.c.l.b16 %v65
    %v105 = vunpack.c.l.b16 %v66
    %v106 = vpack.c.b16 %v91, %v90
    %v107 = vpack.c.b16 %v93, %v92
    %v108 = vpack.c.b16 %v95, %v94
    %v109 = vpack.c.b16 %v97, %v96
    %v110 = vpack.c.b16 %v99, %v98
    %v111 = vpack.c.b16 %v101, %v100
    %v112 = vpack.c.b16 %v103, %v102
    %v113 = vpack.c.b16 %v105, %v104
    %122 = vmatprep.subr.bf16.mxu0 0
    %123 = vmatpush1.bf16.msra.mxu0 %v106
    %124 = vmatprep.subr.bf16.mxu0 0
    %125 = vmatpush1.bf16.msra.mxu0 %v107
    %126 = vmatprep.subr.bf16.mxu0 0
    %127 = vmatpush1.bf16.msra.mxu0 %v108
    %128 = vmatprep.subr.bf16.mxu0 0
    %129 = vmatpush1.bf16.msra.mxu0 %v109
    %130 = vmatprep.subr.bf16.mxu0 0
    %131 = vmatpush1.bf16.msra.mxu0 %v110
    %132 = vmatprep.subr.bf16.mxu0 0
    %133 = vmatpush1.bf16.msra.mxu0 %v111
    %134 = vmatprep.subr.bf16.mxu0 0
    %135 = vmatpush1.bf16.msra.mxu0 %v112
    %136 = vmatprep.subr.bf16.mxu0 0
    %137 = vmatpush1.bf16.msra.mxu0 %v113
    %138 = vmatprep.subr.bf16.mxu0 0
    %139 = vmatpush1.bf16.msra.mxu0 0
    %140 = vmatprep.subr.bf16.mxu0 0
    %141 = vmatpush1.bf16.msra.mxu0 0
    %142 = vmatprep.subr.bf16.mxu0 0
    %143 = vmatpush1.bf16.msra.mxu0 0
    %144 = vmatprep.subr.bf16.mxu0 0
    %145 = vmatpush1.bf16.msra.mxu0 0
    %146 = vmatprep.subr.bf16.mxu0 0
    %147 = vmatpush1.bf16.msra.mxu0 0
    %148 = vmatprep.subr.bf16.mxu0 0
    %149 = vmatpush1.bf16.msra.mxu0 0
    %150 = vmatprep.subr.bf16.mxu0 0
    %151 = vmatpush1.bf16.msra.mxu0 0
    %152 = vmatprep.subr.bf16.mxu0 0
    %153 = vmatpush1.bf16.msra.mxu0 0
    %154 = vmatprep.mubr.bf16.mxu0 0
    %155 = vmatmul.mubr.bf16.gmra.mrb[0].mxu0 %v50
    %v156 = vpop.f32.mrb[0].mxu0
    %v157 = vadd.f32 %v72, %v156
    %v158 = vpop.f32.mrb[0].mxu0
    %v159 = vpop.f32.mrb[0].mxu0
    %v160 = vpop.f32.mrb[0].mxu0
    %161 = vdwg.mxu0
    %v162 = vpack.c.bf16 %v157, %v157
    %v163 = vld [vmem:[#allocation5] sm:$0xf]
    %v164 = vld [vmem:[#allocation5 + $0x4] sm:$0xf]
    %v165 = vld [vmem:[#allocation5 + $0x8] sm:$0xf]
    %v166 = vld [vmem:[#allocation5 + $0xc] sm:$0xf]
    %v167 = vld [vmem:[#allocation5 + $0x10] sm:$0xf]
    %v168 = vld [vmem:[#allocation5 + $0x14] sm:$0xf]
    %v169 = vld [vmem:[#allocation5 + $0x18] sm:$0xf]
    %v170 = vld [vmem:[#allocation5 + $0x1c] sm:$0xf]
    %v171 = vld [vmem:[#allocation5 + $0x20] sm:$0xf]
    %v172 = vld [vmem:[#allocation5 + $0x24] sm:$0xf]
    %v173 = vld [vmem:[#allocation5 + $0x28] sm:$0xf]
    %v174 = vld [vmem:[#allocation5 + $0x2c] sm:$0xf]
    %v175 = vld [vmem:[#allocation5 + $0x30] sm:$0xf]
    %v176 = vld [vmem:[#allocation5 + $0x34] sm:$0xf]
    %v177 = vld [vmem:[#allocation5 + $0x38] sm:$0xf]
    %v178 = vld [vmem:[#allocation5 + $0x3c] sm:$0xf]
    %v179 = vld [vmem:[%s4] sm:$0x1]
    %v181 = vlaneseq
    %v182 = vshrl.u32 %v181, 7
    %v183 = vsub.s32 0, %v182
    %v184 = vrot.slane %v179, %v183
    %v202 = vunpack.c.l.b16 %v163
    %v203 = vunpack.c.l.b16 %v164
    %v204 = vunpack.c.l.b16 %v165
    %v205 = vunpack.c.l.b16 %v166
    %v206 = vunpack.c.l.b16 %v167
    %v207 = vunpack.c.l.b16 %v168
    %v208 = vunpack.c.l.b16 %v169
    %v209 = vunpack.c.l.b16 %v170
    %v210 = vunpack.c.l.b16 %v171
    %v211 = vunpack.c.l.b16 %v172
    %v212 = vunpack.c.l.b16 %v173
    %v213 = vunpack.c.l.b16 %v174
    %v214 = vunpack.c.l.b16 %v175
    %v215 = vunpack.c.l.b16 %v176
    %v216 = vunpack.c.l.b16 %v177
    %v217 = vunpack.c.l.b16 %v178
    %v218 = vpack.c.b16 %v203, %v202
    %v219 = vpack.c.b16 %v205, %v204
    %v220 = vpack.c.b16 %v207, %v206
    %v221 = vpack.c.b16 %v209, %v208
    %v222 = vpack.c.b16 %v211, %v210
    %v223 = vpack.c.b16 %v213, %v212
    %v224 = vpack.c.b16 %v215, %v214
    %v225 = vpack.c.b16 %v217, %v216
    %234 = vmatprep.subr.bf16.mxu0 0
    %235 = vmatpush1.bf16.msra.mxu0 %v218
    %236 = vmatprep.subr.bf16.mxu0 0
    %237 = vmatpush1.bf16.msra.mxu0 %v219
    %238 = vmatprep.subr.bf16.mxu0 0
    %239 = vmatpush1.bf16.msra.mxu0 %v220
    %240 = vmatprep.subr.bf16.mxu0 0
    %241 = vmatpush1.bf16.msra.mxu0 %v221
    %242 = vmatprep.subr.bf16.mxu0 0
    %243 = vmatpush1.bf16.msra.mxu0 %v222
    %244 = vmatprep.subr.bf16.mxu0 0
    %245 = vmatpush1.bf16.msra.mxu0 %v223
    %246 = vmatprep.subr.bf16.mxu0 0
    %247 = vmatpush1.bf16.msra.mxu0 %v224
    %248 = vmatprep.subr.bf16.mxu0 0
    %249 = vmatpush1.bf16.msra.mxu0 %v225
    %250 = vmatprep.subr.bf16.mxu0 0
    %251 = vmatpush1.bf16.msra.mxu0 0
    %252 = vmatprep.subr.bf16.mxu0 0
    %253 = vmatpush1.bf16.msra.mxu0 0
    %254 = vmatprep.subr.bf16.mxu0 0
    %255 = vmatpush1.bf16.msra.mxu0 0
    %256 = vmatprep.subr.bf16.mxu0 0
    %257 = vmatpush1.bf16.msra.mxu0 0
    %258 = vmatprep.subr.bf16.mxu0 0
    %259 = vmatpush1.bf16.msra.mxu0 0
    %260 = vmatprep.subr.bf16.mxu0 0
    %261 = vmatpush1.bf16.msra.mxu0 0
    %262 = vmatprep.subr.bf16.mxu0 0
    %263 = vmatpush1.bf16.msra.mxu0 0
    %264 = vmatprep.subr.bf16.mxu0 0
    %265 = vmatpush1.bf16.msra.mxu0 0
    %266 = vmatprep.mubr.bf16.mxu0 0
    %267 = vmatmul.mubr.bf16.gmra.mrb[0].mxu0 %v162
    %v268 = vpop.f32.mrb[0].mxu0
    %v269 = vadd.f32 %v184, %v268
    %v270 = vpop.f32.mrb[0].mxu0
    %v271 = vpop.f32.mrb[0].mxu0
    %v272 = vpop.f32.mrb[0].mxu0
    %273 = vdwg.mxu0
    %274 = vst [vmem:[#allocation7] sm:$0xff] %v269
    // Predicated region
    $region30: #{_forward.1} parent=1 // pred_check
      _
    $region31: #{_forward.1} parent=1 // pred_check_branch
      %276 = sbr.rel (0) target = $region33
    $region32: #{_forward.1} parent=1 // pred_region
      %s278 = ssub.s32 128, 128
      %279 = vsyncadd [#allocation4], %s278
      %s281 = sshll.u32 [#allocation7], 4
      %s282 = int_to_ptr.vmem [resolvable:$true] %s281
      %284 = dma.vmem_to_hbm [thread:$0]  %s282, 128, %s5, [#allocation4]
    $region33: #{_forward.1} parent=1 // pred_fallthru
      _
    // Predicated region
    $region34: #{_forward.1} parent=1 // pred_check
      _
    $region35: #{_forward.1} parent=1 // pred_check_branch
      %286 = sbr.rel (0) target = $region37
    $region36: #{_forward.1} parent=1 // pred_region
      %287 = dma.done [#allocation4], 128
    $region37: #{_forward.1} parent=1 // pred_fallthru
      _
    %288 = vsyncpa [#allocation3], 1
    %289 = vsyncpa [#allocation6], 1
    %290 = vsyncpa [#allocation4], 1

// kernel: _forward.1
$region0: #{_forward.1}
  #allocation0 [shape = 'u32[]', space=smem, size = 0x4, offset = 0x4, fixed_abs, tag = 'smem constant byte address 0x4 - core index']
  #allocation1 [shape = 'u32[144,128]{1,0:T(1,128)}', space=vmem, size = 0x12000, scoped, tag = 'internal scratch']
  %s0 = inlined_call_operand.vmem [shape: bf16[8,128], index: 0, kind: input, shape index: {}]
  %s1 = inlined_call_operand.hbm [shape: bf16[128,128], index: 1, kind: input, shape index: {}]
  %s2 = inlined_call_operand.vmem [shape: f32[1,128], index: 2, kind: input, shape index: {}]
  %s3 = inlined_call_operand.hbm [shape: bf16[128,128], index: 3, kind: input, shape index: {}]
  %s4 = inlined_call_operand.vmem [shape: f32[1,128], index: 4, kind: input, shape index: {}]
  %s5 = inlined_call_operand.hbm [shape: f32[8,128], index: 5, kind: output, shape index: {}]
  %s6 = sld [smem:[#allocation0]]
  $region38: #{_forward.1} parent=0
    _
  %s8 = ssub.s32 1, %s6
  %s9 = scalar_select 0, %s8, %s6
  $region1: #{_forward.1} parent=0
    #allocation2 [shape = 'u8[32768]{0}', space=vmem, size = 0x8000, scoped, tag = 'input window, operand 1, single buffered']
    #allocation3 [shape = 's32[1]{0}', space=sflag, size = 0x4, scoped, tag = 'scoped memory for _forward.1']
    #allocation4 [shape = 's32[1]{0}', space=sflag, size = 0x4, scoped, tag = 'scoped memory for _forward.1']
    #allocation5 [shape = 'u8[32768]{0}', space=vmem, size = 0x8000, scoped, tag = 'input window, operand 3, single buffered']
    #allocation6 [shape = 's32[1]{0}', space=sflag, size = 0x4, scoped, tag = 'scoped memory for _forward.1']
    #allocation7 [shape = 'u8[4096]{0}', space=vmem, size = 0x1000, scoped, tag = 'output window, operand 0, single buffered']
    %10 = vsyncpa [#allocation3], 0
    %11 = vsyncpa [#allocation6], 0
    %12 = vsyncpa [#allocation4], 0
    // Predicated region
    $region2: #{_forward.1} parent=1 // pred_check
      _
    $region3: #{_forward.1} parent=1 // pred_check_branch
      %14 = sbr.rel (0) target = $region5
    $region4: #{_forward.1} parent=1 // pred_region
      _
    $region5: #{_forward.1} parent=1 // pred_fallthru
      _
    // Predicated region
    $region6: #{_forward.1} parent=1 // pred_check
      _
    $region7: #{_forward.1} parent=1 // pred_check_branch
      %16 = sbr.rel (0) target = $region9
    $region8: #{_forward.1} parent=1 // pred_region
      %s18 = ssub.s32 1024, 1024
      %19 = vsyncadd [#allocation3], %s18
      %s20 = sshll.u32 [#allocation2], 4
      %s21 = int_to_ptr.vmem [resolvable:$true] %s20
      %26 = dma.hbm_to_vmem [thread:$0]  %s1, 1024, %s21, [#allocation3], 64, 64, 4
    $region9: #{_forward.1} parent=1 // pred_fallthru
      _
    // Predicated region
    $region10: #{_forward.1} parent=1 // pred_check
      _
    $region11: #{_forward.1} parent=1 // pred_check_branch
      %28 = sbr.rel (0) target = $region13
    $region12: #{_forward.1} parent=1 // pred_region
      _
    $region13: #{_forward.1} parent=1 // pred_fallthru
      _
    // Predicated region
    $region14: #{_forward.1} parent=1 // pred_check
      _
    $region15: #{_forward.1} parent=1 // pred_check_branch
      %30 = sbr.rel (0) target = $region17
    $region16: #{_forward.1} parent=1 // pred_region
      %s32 = ssub.s32 1024, 1024
      %33 = vsyncadd [#allocation6], %s32
      %s34 = sshll.u32 [#allocation5], 4
      %s35 = int_to_ptr.vmem [resolvable:$true] %s34
      %40 = dma.hbm_to_vmem [thread:$0]  %s3, 1024, %s35, [#allocation6], 64, 64, 4
    $region17: #{_forward.1} parent=1 // pred_fallthru
      _
    // Predicated region
    $region18: #{_forward.1} parent=1 // pred_check
      _
    $region19: #{_forward.1} parent=1 // pred_check_branch
      %42 = sbr.rel (0) target = $region21
    $region20: #{_forward.1} parent=1 // pred_region
      _
    $region21: #{_forward.1} parent=1 // pred_fallthru
      _
    // Predicated region
    $region22: #{_forward.1} parent=1 // pred_check
      _
    $region23: #{_forward.1} parent=1 // pred_check_branch
      %44 = sbr.rel (0) target = $region25
    $region24: #{_forward.1} parent=1 // pred_region
      %45 = dma.done [#allocation3], 1024
    $region25: #{_forward.1} parent=1 // pred_fallthru
      _
    // Predicated region
    $region26: #{_forward.1} parent=1 // pred_check
      _
    $region27: #{_forward.1} parent=1 // pred_check_branch
      %47 = sbr.rel (0) target = $region29
    $region28: #{_forward.1} parent=1 // pred_region
      %48 = dma.done [#allocation6], 1024
    $region29: #{_forward.1} parent=1 // pred_fallthru
      _
    %v50 = vld [vmem:[%s0] sm:$0xf]
    %v51 = vld [vmem:[#allocation2] sm:$0xf]
    %v52 = vld [vmem:[#allocation2 + $0x4] sm:$0xf]
    %v53 = vld [vmem:[#allocation2 + $0x8] sm:$0xf]
    %v54 = vld [vmem:[#allocation2 + $0xc] sm:$0xf]
    %v55 = vld [vmem:[#allocation2 + $0x10] sm:$0xf]
    %v56 = vld [vmem:[#allocation2 + $0x14] sm:$0xf]
    %v57 = vld [vmem:[#allocation2 + $0x18] sm:$0xf]
    %v58 = vld [vmem:[#allocation2 + $0x1c] sm:$0xf]
    %v59 = vld [vmem:[#allocation2 + $0x20] sm:$0xf]
    %v60 = vld [vmem:[#allocation2 + $0x24] sm:$0xf]
    %v61 = vld [vmem:[#allocation2 + $0x28] sm:$0xf]
    %v62 = vld [vmem:[#allocation2 + $0x2c] sm:$0xf]
    %v63 = vld [vmem:[#allocation2 + $0x30] sm:$0xf]
    %v64 = vld [vmem:[#allocation2 + $0x34] sm:$0xf]
    %v65 = vld [vmem:[#allocation2 + $0x38] sm:$0xf]
    %v66 = vld [vmem:[#allocation2 + $0x3c] sm:$0xf]
    %v67 = vld [vmem:[%s2] sm:$0x1]
    %v69 = vlaneseq
    %v70 = vshrl.u32 %v69, 7
    %v71 = vsub.s32 0, %v70
    %v72 = vrot.slane %v67, %v71
    %v90 = vunpack.c.l.b16 %v51
    %v91 = vunpack.c.l.b16 %v52
    %v92 = vunpack.c.l.b16 %v53
    %v93 = vunpack.c.l.b16 %v54
    %v94 = vunpack.c.l.b16 %v55
    %v95 = vunpack.c.l.b16 %v56
    %v96 = vunpack.c.l.b16 %v57
    %v97 = vunpack.c.l.b16 %v58
    %v98 = vunpack.c.l.b16 %v59
    %v99 = vunpack.c.l.b16 %v60
    %v100 = vunpack.c.l.b16 %v61
    %v101 = vunpack.c.l.b16 %v62
    %v102 = vunpack.c.l.b16 %v63
    %v103 = vunpack.c.l.b16 %v64
    %v104 = vunpack.c.l.b16 %v65
    %v105 = vunpack.c.l.b16 %v66
    %v106 = vpack.c.b16 %v91, %v90
    %v107 = vpack.c.b16 %v93, %v92
    %v108 = vpack.c.b16 %v95, %v94
    %v109 = vpack.c.b16 %v97, %v96
    %v110 = vpack.c.b16 %v99, %v98
    %v111 = vpack.c.b16 %v101, %v100
    %v112 = vpack.c.b16 %v103, %v102
    %v113 = vpack.c.b16 %v105, %v104
    %122 = vmatprep.subr.bf16.mxu0 0
    %123 = vmatpush1.bf16.msra.mxu0 %v106
    %124 = vmatprep.subr.bf16.mxu0 0
    %125 = vmatpush1.bf16.msra.mxu0 %v107
    %126 = vmatprep.subr.bf16.mxu0 0
    %127 = vmatpush1.bf16.msra.mxu0 %v108
    %128 = vmatprep.subr.bf16.mxu0 0
    %129 = vmatpush1.bf16.msra.mxu0 %v109
    %130 = vmatprep.subr.bf16.mxu0 0
    %131 = vmatpush1.bf16.msra.mxu0 %v110
    %132 = vmatprep.subr.bf16.mxu0 0
    %133 = vmatpush1.bf16.msra.mxu0 %v111
    %134 = vmatprep.subr.bf16.mxu0 0
    %135 = vmatpush1.bf16.msra.mxu0 %v112
    %136 = vmatprep.subr.bf16.mxu0 0
    %137 = vmatpush1.bf16.msra.mxu0 %v113
    %138 = vmatprep.subr.bf16.mxu0 0
    %139 = vmatpush1.bf16.msra.mxu0 0
    %140 = vmatprep.subr.bf16.mxu0 0
    %141 = vmatpush1.bf16.msra.mxu0 0
    %142 = vmatprep.subr.bf16.mxu0 0
    %143 = vmatpush1.bf16.msra.mxu0 0
    %144 = vmatprep.subr.bf16.mxu0 0
    %145 = vmatpush1.bf16.msra.mxu0 0
    %146 = vmatprep.subr.bf16.mxu0 0
    %147 = vmatpush1.bf16.msra.mxu0 0
    %148 = vmatprep.subr.bf16.mxu0 0
    %149 = vmatpush1.bf16.msra.mxu0 0
    %150 = vmatprep.subr.bf16.mxu0 0
    %151 = vmatpush1.bf16.msra.mxu0 0
    %152 = vmatprep.subr.bf16.mxu0 0
    %153 = vmatpush1.bf16.msra.mxu0 0
    %154 = vmatprep.mubr.bf16.mxu0 0
    %155 = vmatmul.mubr.bf16.gmra.mrb[0].mxu0 %v50
    %v156 = vpop.f32.mrb[0].mxu0
    %v157 = vadd.f32 %v72, %v156
    %v158 = vpop.f32.mrb[0].mxu0
    %v159 = vpop.f32.mrb[0].mxu0
    %v160 = vpop.f32.mrb[0].mxu0
    %161 = vdwg.mxu0
    %v162 = vpack.c.bf16 %v157, %v157
    %v163 = vld [vmem:[#allocation5] sm:$0xf]
    %v164 = vld [vmem:[#allocation5 + $0x4] sm:$0xf]
    %v165 = vld [vmem:[#allocation5 + $0x8] sm:$0xf]
    %v166 = vld [vmem:[#allocation5 + $0xc] sm:$0xf]
    %v167 = vld [vmem:[#allocation5 + $0x10] sm:$0xf]
    %v168 = vld [vmem:[#allocation5 + $0x14] sm:$0xf]
    %v169 = vld [vmem:[#allocation5 + $0x18] sm:$0xf]
    %v170 = vld [vmem:[#allocation5 + $0x1c] sm:$0xf]
    %v171 = vld [vmem:[#allocation5 + $0x20] sm:$0xf]
    %v172 = vld [vmem:[#allocation5 + $0x24] sm:$0xf]
    %v173 = vld [vmem:[#allocation5 + $0x28] sm:$0xf]
    %v174 = vld [vmem:[#allocation5 + $0x2c] sm:$0xf]
    %v175 = vld [vmem:[#allocation5 + $0x30] sm:$0xf]
    %v176 = vld [vmem:[#allocation5 + $0x34] sm:$0xf]
    %v177 = vld [vmem:[#allocation5 + $0x38] sm:$0xf]
    %v178 = vld [vmem:[#allocation5 + $0x3c] sm:$0xf]
    %v179 = vld [vmem:[%s4] sm:$0x1]
    %v181 = vlaneseq
    %v182 = vshrl.u32 %v181, 7
    %v183 = vsub.s32 0, %v182
    %v184 = vrot.slane %v179, %v183
    %v202 = vunpack.c.l.b16 %v163
    %v203 = vunpack.c.l.b16 %v164
    %v204 = vunpack.c.l.b16 %v165
    %v205 = vunpack.c.l.b16 %v166
    %v206 = vunpack.c.l.b16 %v167
    %v207 = vunpack.c.l.b16 %v168
    %v208 = vunpack.c.l.b16 %v169
    %v209 = vunpack.c.l.b16 %v170
    %v210 = vunpack.c.l.b16 %v171
    %v211 = vunpack.c.l.b16 %v172
    %v212 = vunpack.c.l.b16 %v173
    %v213 = vunpack.c.l.b16 %v174
    %v214 = vunpack.c.l.b16 %v175
    %v215 = vunpack.c.l.b16 %v176
    %v216 = vunpack.c.l.b16 %v177
    %v217 = vunpack.c.l.b16 %v178
    %v218 = vpack.c.b16 %v203, %v202
    %v219 = vpack.c.b16 %v205, %v204
    %v220 = vpack.c.b16 %v207, %v206
    %v221 = vpack.c.b16 %v209, %v208
    %v222 = vpack.c.b16 %v211, %v210
    %v223 = vpack.c.b16 %v213, %v212
    %v224 = vpack.c.b16 %v215, %v214
    %v225 = vpack.c.b16 %v217, %v216
    %234 = vmatprep.subr.bf16.mxu0 0
    %235 = vmatpush1.bf16.msra.mxu0 %v218
    %236 = vmatprep.subr.bf16.mxu0 0
    %237 = vmatpush1.bf16.msra.mxu0 %v219
    %238 = vmatprep.subr.bf16.mxu0 0
    %239 = vmatpush1.bf16.msra.mxu0 %v220
    %240 = vmatprep.subr.bf16.mxu0 0
    %241 = vmatpush1.bf16.msra.mxu0 %v221
    %242 = vmatprep.subr.bf16.mxu0 0
    %243 = vmatpush1.bf16.msra.mxu0 %v222
    %244 = vmatprep.subr.bf16.mxu0 0
    %245 = vmatpush1.bf16.msra.mxu0 %v223
    %246 = vmatprep.subr.bf16.mxu0 0
    %247 = vmatpush1.bf16.msra.mxu0 %v224
    %248 = vmatprep.subr.bf16.mxu0 0
    %249 = vmatpush1.bf16.msra.mxu0 %v225
    %250 = vmatprep.subr.bf16.mxu0 0
    %251 = vmatpush1.bf16.msra.mxu0 0
    %252 = vmatprep.subr.bf16.mxu0 0
    %253 = vmatpush1.bf16.msra.mxu0 0
    %254 = vmatprep.subr.bf16.mxu0 0
    %255 = vmatpush1.bf16.msra.mxu0 0
    %256 = vmatprep.subr.bf16.mxu0 0
    %257 = vmatpush1.bf16.msra.mxu0 0
    %258 = vmatprep.subr.bf16.mxu0 0
    %259 = vmatpush1.bf16.msra.mxu0 0
    %260 = vmatprep.subr.bf16.mxu0 0
    %261 = vmatpush1.bf16.msra.mxu0 0
    %262 = vmatprep.subr.bf16.mxu0 0
    %263 = vmatpush1.bf16.msra.mxu0 0
    %264 = vmatprep.subr.bf16.mxu0 0
    %265 = vmatpush1.bf16.msra.mxu0 0
    %266 = vmatprep.mubr.bf16.mxu0 0
    %267 = vmatmul.mubr.bf16.gmra.mrb[0].mxu0 %v162
    %v268 = vpop.f32.mrb[0].mxu0
    %v269 = vadd.f32 %v184, %v268
    %v270 = vpop.f32.mrb[0].mxu0
    %v271 = vpop.f32.mrb[0].mxu0
    %v272 = vpop.f32.mrb[0].mxu0
    %273 = vdwg.mxu0
    %274 = vst [vmem:[#allocation7] sm:$0xff] %v269
    // Predicated region
    $region30: #{_forward.1} parent=1 // pred_check
      _
    $region31: #{_forward.1} parent=1 // pred_check_branch
      %276 = sbr.rel (0) target = $region33
    $region32: #{_forward.1} parent=1 // pred_region
      %s278 = ssub.s32 128, 128
      %279 = vsyncadd [#allocation4], %s278
      %s281 = sshll.u32 [#allocation7], 4
      %s282 = int_to_ptr.vmem [resolvable:$true] %s281
      %284 = dma.vmem_to_hbm [thread:$0]  %s282, 128, %s5, [#allocation4]
    $region33: #{_forward.1} parent=1 // pred_fallthru
      _
    // Predicated region
    $region34: #{_forward.1} parent=1 // pred_check
      _
    $region35: #{_forward.1} parent=1 // pred_check_branch
      %286 = sbr.rel (0) target = $region37
    $region36: #{_forward.1} parent=1 // pred_region
      %287 = dma.done [#allocation4], 128
    $region37: #{_forward.1} parent=1 // pred_fallthru
      _
    %288 = vsyncpa [#allocation3], 1
    %289 = vsyncpa [#allocation6], 1
    %290 = vsyncpa [#allocation4], 1

</llo_original>
